<compile_context>
chip_gen: v7x
topology: tpu7x:2x2x1
jax: 0.10.0
libtpu: 0.0.40
codegen_flags: <defaults>
</compile_context>

<pallas_src>
import functools

import jax
import jax.numpy as jnp
from jax.experimental import pallas as pl
from jax.experimental.pallas import tpu as pltpu


# ----------------------------------------------------------------------------
# Pallas kernel: one (batch group, L tile) step of the whole residual block.
# ----------------------------------------------------------------------------
def _temporal_block_kernel(x_ref,    # (NB, C_in, TL)   input tile (NCL)
                           w1_ref,   # (M1, K*C_in)     bf16; conv1 rows + fused 1x1 rows
                           b1_ref,   # (M1, 1)          f32
                           w2_ref,   # (C_out, K*C_out) bf16
                           b2_ref,   # (C_out, 1)       f32
                           o_ref,    # (NB, C_out, TL)  output tile
                           xc_ref,   # VMEM (NB, C_in,  pad) bf16 causal carry of x
                           hc_ref,   # VMEM (NB, C_out, pad) bf16 causal carry of h1
                           *, kernel_size, dilation, c_out, has_downsample,
                           fuse_taps):
    K, d = kernel_size, dilation
    j = pl.program_id(1)

    # First L-tile of every batch group: the causal prefix is zeros.
    @pl.when(j == 0)
    def _():
        xc_ref[...] = jnp.zeros_like(xc_ref)
        hc_ref[...] = jnp.zeros_like(hc_ref)

    nb, c_in, tl = x_ref.shape

    def dilated_matmul(ext, w_ref_, b_ref_, cc):
        """Causal dilated conv of one batch element via MXU matmul(s).

        ext: (cc, pad+tl) bf16 extended sequence; w_ref_: (M, K*cc) bf16.
        """
        if fuse_taps:
            # Stack the K dilated taps along the contraction axis -> one matmul.
            taps = jnp.concatenate(
                [ext[:, t * d: t * d + tl] for t in range(K)], axis=0)  # (K*cc, tl)
            acc = jnp.dot(w_ref_[...], taps, preferred_element_type=jnp.float32)
        else:
            # Large K*cc: skip the taps materialization, accumulate K matmuls.
            acc = jnp.dot(w_ref_[:, (K - 1) * cc:],
                          ext[:, (K - 1) * d:(K - 1) * d + tl],
                          preferred_element_type=jnp.float32)
            for t in range(K - 1):
                acc = acc + jnp.dot(w_ref_[:, t * cc:(t + 1) * cc],
                                    ext[:, t * d:t * d + tl],
                                    preferred_element_type=jnp.float32)
        return acc + b_ref_[...]

    for b in range(nb):                   # NB is small & static -> unrolled
        x_in = x_ref[b]                                      # (C_in, TL)
        x_bf = x_in.astype(jnp.bfloat16)

        # ---- conv1 (+ fused 1x1 downsample) --------------------------------
        x_ext = jnp.concatenate([xc_ref[b], x_bf], axis=1)   # (C_in, pad+TL)
        xc_ref[b] = x_ext[:, tl:]                            # carry for next L tile
        h_comb = dilated_matmul(x_ext, w1_ref, b1_ref, c_in)  # (M1, TL) f32

        h1 = jnp.maximum(h_comb[:c_out, :], 0.0)             # chomp + ReLU
        if has_downsample:
            res = h_comb[c_out:, :]                          # 1x1 downsample rows (no ReLU)
        else:
            res = x_in.astype(jnp.float32)                   # identity skip kept in f32
        # TODO(synk): dropout1/dropout2 are inference-mode identities here.
        h1_bf = h1.astype(jnp.bfloat16)

        # ---- conv2 ----------------------------------------------------------
        h_ext = jnp.concatenate([hc_ref[b], h1_bf], axis=1)  # (C_out, pad+TL)
        hc_ref[b] = h_ext[:, tl:]
        h2 = jnp.maximum(dilated_matmul(h_ext, w2_ref, b2_ref, c_out), 0.0)

        # ---- final residual add + ReLU, lane-dense store --------------------
        o_ref[b] = jnp.maximum(h2 + res, 0.0).astype(o_ref.dtype)


# ----------------------------------------------------------------------------
# Wrapper helpers
# ----------------------------------------------------------------------------
def weight_norm_effective(v, g):
    """PyTorch weight_norm (dim=0): w = g * v / ||v||, norm over (in, k)."""
    norm = jnp.sqrt(jnp.sum(v * v, axis=(1, 2), keepdims=True))
    return g * v / norm


def _flatten_taps(w):
    """(C_out, C_in, K) -> (C_out, K*C_in), tap-major column order."""
    c_out, c_in, k = w.shape
    return jnp.transpose(w, (0, 2, 1)).reshape(c_out, k * c_in)


def _vmem_capacity_bytes():
    try:
        cap = getattr(pltpu.get_tpu_info(), "vmem_capacity_bytes", None)
        if cap:
            return int(cap)
    except Exception:
        pass
    return 64 * 1024 * 1024            # conservative: v7x per-TensorCore VMEM


def _pick_nb(n, cap=8):
    """Batch elements folded into one grid step (largest divisor of N <= cap)."""
    for nb in range(min(n, cap), 0, -1):
        if n % nb == 0:
            return nb
    return 1


def _pick_tiling(L, nb, c_in, c_out, K, in_bytes, out_bytes, vmem_cap, max_tile_l):
    """Largest lane tile (multiple of 128) whose working set fits the VMEM budget."""
    per_col = (2 * nb * (c_in * in_bytes + c_out * out_bytes)   # dbl-buffered I/O blocks
               + 2 * (K * c_in + K * c_out + c_in + c_out)      # bf16 ext/tap buffers
               + 4 * 4 * c_out)                                 # f32 intermediates
    budget = int(vmem_cap * 0.6)
    max_tl = max(128, (budget // per_col) // 128 * 128)
    max_tl = min(max_tl, 2048)
    if max_tile_l is not None:
        max_tl = min(max_tl, max(128, int(max_tile_l)))
    if L <= max_tl:
        return L, L                      # single full-extent tile, no padding
    tile = max_tl
    return tile, int(pl.cdiv(L, tile)) * tile


# ----------------------------------------------------------------------------
# Forward pass
# ----------------------------------------------------------------------------
@functools.partial(jax.jit, static_argnames=("kernel_size", "dilation", "padding",
                                             "out_dtype", "max_tile_l"))
def temporal_block_forward(x, params, *, kernel_size, dilation, padding,
                           out_dtype=None, max_tile_l=None):
    """x: (N, C_in, L) in PyTorch NCL layout.  Returns (N, C_out, L)."""
    assert kernel_size >= 2, "kernel_size == 1 degenerates to a 1x1 conv"  # TODO(synk): K=1
    assert padding == dilation * (kernel_size - 1), "TCN causal padding expected"
    N, C_in, L = x.shape
    K = kernel_size
    out_dtype = x.dtype if out_dtype is None else jnp.dtype(out_dtype)

    # weight_norm'd conv weights; K taps flattened along the contraction axis.
    w1 = weight_norm_effective(params["v1"], params["g1"])          # (C_out, C_in, K)
    w2 = weight_norm_effective(params["v2"], params["g2"])          # (C_out, C_out, K)
    C_out = w1.shape[0]
    w1f = _flatten_taps(w1)                                          # (C_out, K*C_in)
    w2f = _flatten_taps(w2).astype(jnp.bfloat16)                     # (C_out, K*C_out)
    b1 = params["b1"].reshape(C_out, 1).astype(jnp.float32)
    b2 = params["b2"].reshape(C_out, 1).astype(jnp.float32)

    has_downsample = params.get("wd", None) is not None
    if has_downsample:
        # Fuse the 1x1 downsample into conv1's matmul: its weights act on the
        # "current sample" tap (t = K-1); its rows are stacked under conv1's.
        wd = params["wd"][:, :, 0]                                   # (C_out, C_in)
        wd_pad = jnp.concatenate(
            [jnp.zeros((C_out, (K - 1) * C_in), w1f.dtype), wd], axis=1)
        w1c = jnp.concatenate([w1f, wd_pad], axis=0).astype(jnp.bfloat16)
        b1c = jnp.concatenate(
            [b1, params["bd"].reshape(C_out, 1).astype(jnp.float32)], axis=0)
    else:
        assert C_in == C_out, "identity residual requires n_inputs == n_outputs"
        w1c = w1f.astype(jnp.bfloat16)
        b1c = b1
    M1 = w1c.shape[0]

    # Grid / tiling: fold NB batch elements per step; size TILE_L against VMEM.
    NB = _pick_nb(N)
    vmem_cap = _vmem_capacity_bytes()
    tile_l, L_pad = _pick_tiling(L, NB, C_in, C_out, K,
                                 x.dtype.itemsize, out_dtype.itemsize,
                                 vmem_cap, max_tile_l)
    if L_pad != L:
        # Trailing zero pad is causally inert; the tail is sliced off below.
        x = jnp.pad(x, ((0, 0), (0, 0), (0, L_pad - L)))
    grid = (N // NB, L_pad // tile_l)

    kernel = functools.partial(
        _temporal_block_kernel,
        kernel_size=K, dilation=dilation, c_out=C_out,
        has_downsample=has_downsample,
        fuse_taps=(K * max(C_in, C_out) <= 256))
    const = lambda n, j: (0, 0)          # weights/biases resident across the grid

    out = pl.pallas_call(
        kernel,
        out_shape=jax.ShapeDtypeStruct((N, C_out, L_pad), out_dtype),
        grid_spec=pltpu.PrefetchScalarGridSpec(
            num_scalar_prefetch=0,
            grid=grid,
            in_specs=[
                pl.BlockSpec((NB, C_in, tile_l), lambda n, j: (n, 0, j)),
                pl.BlockSpec((M1, K * C_in), const),
                pl.BlockSpec((M1, 1), const),
                pl.BlockSpec((C_out, K * C_out), const),
                pl.BlockSpec((C_out, 1), const),
            ],
            out_specs=pl.BlockSpec((NB, C_out, tile_l), lambda n, j: (n, 0, j)),
            scratch_shapes=[
                pltpu.VMEM((NB, C_in, padding), jnp.bfloat16),   # x causal carry
                pltpu.VMEM((NB, C_out, padding), jnp.bfloat16),  # h1 causal carry
            ],
        ),
        compiler_params=pltpu.CompilerParams(
            # Batch-group axis may shard across TensorCores; the L axis is
            # sequential because the causal carry flows tile -> tile.
            # TODO(synk): halo-recompute scheme would let the L axis go
            # parallel on v7x when the batch-group axis has size 1.
            dimension_semantics=("parallel", "arbitrary"),
            vmem_limit_bytes=min(int(vmem_cap * 0.8), 100 * 1024 * 1024),
        ),
    )(x, w1c, b1c, w2f, b2)

    if L_pad != L:
        out = out[:, :, :L]
    return out


# ----------------------------------------------------------------------------
# Pure-JAX reference (lax.conv) used for a correctness check
# ----------------------------------------------------------------------------
def reference_forward(x, params, *, kernel_size, dilation, padding):
    w1 = weight_norm_effective(params["v1"], params["g1"])
    w2 = weight_norm_effective(params["v2"], params["g2"])
    L = x.shape[2]

    def conv(inp, w, b, dil, pad):
        dn = jax.lax.conv_dimension_numbers(inp.shape, w.shape, ("NCH", "OIH", "NCH"))
        y = jax.lax.conv_general_dilated(inp, w, window_strides=(1,),
                                         padding=[(pad, pad)], rhs_dilation=(dil,),
                                         dimension_numbers=dn)
        return y + b[None, :, None]

    h = jnp.maximum(conv(x, w1, params["b1"], dilation, padding)[:, :, :L], 0.0)
    h = jnp.maximum(conv(h, w2, params["b2"], dilation, padding)[:, :, :L], 0.0)
    if params.get("wd", None) is not None:
        res = conv(x, params["wd"], params["bd"], 1, 0)
    else:
        res = x
    return jnp.maximum(h + res, 0.0)


# ----------------------------------------------------------------------------
if __name__ == "__main__":
    # module config: TemporalBlock(n_inputs=4, n_outputs=8, kernel_size=3,
    #                              stride=1, dilation=2, padding=4)
    N, C_in, C_out, L = 2, 4, 8, 16
    K, dilation = 3, 2
    padding = dilation * (K - 1)

    key = jax.random.PRNGKey(0)
    ks = jax.random.split(key, 10)
    params = {
        # weight_norm parametrization of conv1 / conv2
        "v1": 0.01 * jax.random.normal(ks[0], (C_out, C_in, K), jnp.float32),
        "g1": 1.0 + 0.1 * jax.random.normal(ks[1], (C_out, 1, 1), jnp.float32),
        "b1": 0.05 * jax.random.normal(ks[2], (C_out,), jnp.float32),
        "v2": 0.01 * jax.random.normal(ks[3], (C_out, C_out, K), jnp.float32),
        "g2": 1.0 + 0.1 * jax.random.normal(ks[4], (C_out, 1, 1), jnp.float32),
        "b2": 0.05 * jax.random.normal(ks[5], (C_out,), jnp.float32),
        # downsample 1x1 conv (n_inputs != n_outputs)
        "wd": 0.01 * jax.random.normal(ks[6], (C_out, C_in, 1), jnp.float32),
        "bd": 0.05 * jax.random.normal(ks[7], (C_out,), jnp.float32),
    }
    x = jax.random.normal(ks[8], (N, C_in, L), jnp.float32)

    out = jax.block_until_ready(
        temporal_block_forward(x, params, kernel_size=K, dilation=dilation,
                               padding=padding))
    ref = reference_forward(x, params, kernel_size=K, dilation=dilation,
                            padding=padding)
    assert out.shape == (N, C_out, L)
    assert jnp.allclose(out, ref, atol=1e-2, rtol=1e-2), (
        f"mismatch vs reference, max|d|={float(jnp.max(jnp.abs(out - ref)))}")

    # Multi-L-tile + ragged-L path: exercises the cross-tile causal carry and
    # the trailing-pad/slice logic (tile forced to 128 lanes).
    L2 = 200
    x2 = jax.random.normal(ks[9], (N, C_in, L2), jnp.float32)
    out2 = jax.block_until_ready(
        temporal_block_forward(x2, params, kernel_size=K, dilation=dilation,
                               padding=padding, max_tile_l=128))
    ref2 = reference_forward(x2, params, kernel_size=K, dilation=dilation,
                             padding=padding)
    assert jnp.allclose(out2, ref2, atol=1e-2, rtol=1e-2), (
        f"multi-tile mismatch, max|d|={float(jnp.max(jnp.abs(out2 - ref2)))}")

    print("KERNEL_OK")
</pallas_src>

<mosaic_0001>
module attributes {stable_mosaic.version = 11 : i64} {
  func.func @_temporal_block_kernel(%arg0: i32, %arg1: i32, %arg2: memref<2x4x16xf32, #tpu.memory_space<vmem>>, %arg3: memref<16x12xbf16, #tpu.memory_space<vmem>>, %arg4: memref<16x1xf32, #tpu.memory_space<vmem>>, %arg5: memref<8x24xbf16, #tpu.memory_space<vmem>>, %arg6: memref<8x1xf32, #tpu.memory_space<vmem>>, %arg7: memref<2x8x16xf32, #tpu.memory_space<vmem>>, %arg8: memref<2x4x4xbf16, #tpu.memory_space<vmem>>, %arg9: memref<2x8x4xbf16, #tpu.memory_space<vmem>>) attributes {dimension_semantics = [#tpu.dimension_semantics<parallel>, #tpu.dimension_semantics<arbitrary>], iteration_bounds = array<i64: 1, 1>, scalar_prefetch = 0 : i64, scratch_operands = 2 : i64, tpu.core_type = #tpu.core_type<tc>, window_params = [{transform_indices = @transform_0, window_bounds = array<i64: 2, 4, 16>}, {pipeline_mode = #tpu.pipeline_mode<synchronous>, transform_indices = @transform_1, window_bounds = array<i64: 16, 12>}, {pipeline_mode = #tpu.pipeline_mode<synchronous>, transform_indices = @transform_2, window_bounds = array<i64: 16, 1>}, {pipeline_mode = #tpu.pipeline_mode<synchronous>, transform_indices = @transform_3, window_bounds = array<i64: 8, 24>}, {pipeline_mode = #tpu.pipeline_mode<synchronous>, transform_indices = @transform_4, window_bounds = array<i64: 8, 1>}, {transform_indices = @transform_5, window_bounds = array<i64: 2, 8, 16>}]} {
    %c0_i32 = arith.constant 0 : i32
    %0 = arith.cmpi eq, %arg1, %c0_i32 : i32
    %1 = arith.extui %0 : i1 to i32
    %c0_i32_0 = arith.constant 0 : i32
    %2 = arith.cmpi ne, %1, %c0_i32_0 : i32
    scf.if %2 {
      %cst_60 = arith.constant 0.000000e+00 : bf16
      %99 = vector.broadcast %cst_60 : bf16 to vector<2x4x4xbf16>
      %c0_61 = arith.constant 0 : index
      %c0_62 = arith.constant 0 : index
      %c0_63 = arith.constant 0 : index
      %100 = vector.load %arg8[%c0_61, %c0_62, %c0_63] : memref<2x4x4xbf16, #tpu.memory_space<vmem>>, vector<2x4x4xbf16>
      tpu.vector_store %arg8[%c0_61, %c0_62, %c0_63], %99 {strides = array<i32>} : memref<2x4x4xbf16, #tpu.memory_space<vmem>>, vector<2x4x4xbf16>,
      %cst_64 = arith.constant 0.000000e+00 : bf16
      %101 = vector.broadcast %cst_64 : bf16 to vector<2x8x4xbf16>
      %c0_65 = arith.constant 0 : index
      %c0_66 = arith.constant 0 : index
      %c0_67 = arith.constant 0 : index
      %102 = vector.load %arg9[%c0_65, %c0_66, %c0_67] : memref<2x8x4xbf16, #tpu.memory_space<vmem>>, vector<2x8x4xbf16>
      tpu.vector_store %arg9[%c0_65, %c0_66, %c0_67], %101 {strides = array<i32>} : memref<2x8x4xbf16, #tpu.memory_space<vmem>>, vector<2x8x4xbf16>,
    } else {
    }
    %c0 = arith.constant 0 : index
    %c0_1 = arith.constant 0 : index
    %c0_2 = arith.constant 0 : index
    %3 = vector.load %arg2[%c0, %c0_1, %c0_2] : memref<2x4x16xf32, #tpu.memory_space<vmem>>, vector<1x4x16xf32>
    %4 = vector.shape_cast %3 : vector<1x4x16xf32> to vector<4x16xf32>
    %5 = arith.truncf %4 : vector<4x16xf32> to vector<4x16xbf16>
    %c0_3 = arith.constant 0 : index
    %c0_4 = arith.constant 0 : index
    %c0_5 = arith.constant 0 : index
    %6 = vector.load %arg8[%c0_3, %c0_4, %c0_5] : memref<2x4x4xbf16, #tpu.memory_space<vmem>>, vector<1x4x4xbf16>
    %7 = vector.shape_cast %6 : vector<1x4x4xbf16> to vector<4x4xbf16>
    %8 = tpu.concatenate %7, %5 in 1 : vector<4x4xbf16>, vector<4x16xbf16> -> vector<4x20xbf16>
    %9 = vector.extract_strided_slice %8 {offsets = [0, 16], sizes = [4, 4], strides = [1, 1]} : vector<4x20xbf16> to vector<4x4xbf16>
    %c0_6 = arith.constant 0 : index
    %c0_7 = arith.constant 0 : index
    %c0_8 = arith.constant 0 : index
    %10 = vector.load %arg8[%c0_6, %c0_7, %c0_8] : memref<2x4x4xbf16, #tpu.memory_space<vmem>>, vector<1x4x4xbf16>
    %11 = vector.shape_cast %10 : vector<1x4x4xbf16> to vector<4x4xbf16>
    %12 = vector.shape_cast %9 : vector<4x4xbf16> to vector<1x4x4xbf16>
    tpu.vector_store %arg8[%c0_6, %c0_7, %c0_8], %12 {strides = array<i32>} : memref<2x4x4xbf16, #tpu.memory_space<vmem>>, vector<1x4x4xbf16>,
    %13 = vector.extract_strided_slice %8 {offsets = [0, 0], sizes = [4, 16], strides = [1, 1]} : vector<4x20xbf16> to vector<4x16xbf16>
    %14 = vector.extract_strided_slice %8 {offsets = [0, 2], sizes = [4, 16], strides = [1, 1]} : vector<4x20xbf16> to vector<4x16xbf16>
    %15 = vector.extract_strided_slice %8 {offsets = [0, 4], sizes = [4, 16], strides = [1, 1]} : vector<4x20xbf16> to vector<4x16xbf16>
    %16 = tpu.concatenate %13, %14, %15 in 0 : vector<4x16xbf16>, vector<4x16xbf16>, vector<4x16xbf16> -> vector<12x16xbf16>
    %c0_9 = arith.constant 0 : index
    %c0_10 = arith.constant 0 : index
    %17 = vector.load %arg3[%c0_9, %c0_10] : memref<16x12xbf16, #tpu.memory_space<vmem>>, vector<16x12xbf16>
    %cst = arith.constant dense<0.000000e+00> : vector<16x16xf32>
    %18 = tpu.matmul %17, %16, %cst {dimension_numbers = #tpu.dot_dimension_numbers<[1], [0], [0], [1], [0, 0, 1, 1], [], []>} : vector<16x12xbf16>, vector<12x16xbf16>, vector<16x16xf32> -> vector<16x16xf32>
    %c0_11 = arith.constant 0 : index
    %c0_12 = arith.constant 0 : index
    %19 = vector.load %arg4[%c0_11, %c0_12] : memref<16x1xf32, #tpu.memory_space<vmem>>, vector<16x1xf32>
    %20 = vector.broadcast %19 : vector<16x1xf32> to vector<16x16xf32>
    %21 = arith.addf %18, %20 : vector<16x16xf32>
    %22 = vector.extract_strided_slice %21 {offsets = [0, 0], sizes = [8, 16], strides = [1, 1]} : vector<16x16xf32> to vector<8x16xf32>
    %cst_13 = arith.constant 0.000000e+00 : f32
    %23 = vector.broadcast %cst_13 : f32 to vector<8x16xf32>
    %24 = arith.maximumf %22, %23 : vector<8x16xf32>
    %25 = vector.extract_strided_slice %21 {offsets = [8, 0], sizes = [8, 16], strides = [1, 1]} : vector<16x16xf32> to vector<8x16xf32>
    %26 = arith.truncf %24 : vector<8x16xf32> to vector<8x16xbf16>
    %c0_14 = arith.constant 0 : index
    %c0_15 = arith.constant 0 : index
    %c0_16 = arith.constant 0 : index
    %27 = vector.load %arg9[%c0_14, %c0_15, %c0_16] : memref<2x8x4xbf16, #tpu.memory_space<vmem>>, vector<1x8x4xbf16>
    %28 = vector.shape_cast %27 : vector<1x8x4xbf16> to vector<8x4xbf16>
    %29 = tpu.concatenate %28, %26 in 1 : vector<8x4xbf16>, vector<8x16xbf16> -> vector<8x20xbf16>
    %30 = vector.extract_strided_slice %29 {offsets = [0, 16], sizes = [8, 4], strides = [1, 1]} : vector<8x20xbf16> to vector<8x4xbf16>
    %c0_17 = arith.constant 0 : index
    %c0_18 = arith.constant 0 : index
    %c0_19 = arith.constant 0 : index
    %31 = vector.load %arg9[%c0_17, %c0_18, %c0_19] : memref<2x8x4xbf16, #tpu.memory_space<vmem>>, vector<1x8x4xbf16>
    %32 = vector.shape_cast %31 : vector<1x8x4xbf16> to vector<8x4xbf16>
    %33 = vector.shape_cast %30 : vector<8x4xbf16> to vector<1x8x4xbf16>
    tpu.vector_store %arg9[%c0_17, %c0_18, %c0_19], %33 {strides = array<i32>} : memref<2x8x4xbf16, #tpu.memory_space<vmem>>, vector<1x8x4xbf16>,
    %34 = vector.extract_strided_slice %29 {offsets = [0, 0], sizes = [8, 16], strides = [1, 1]} : vector<8x20xbf16> to vector<8x16xbf16>
    %35 = vector.extract_strided_slice %29 {offsets = [0, 2], sizes = [8, 16], strides = [1, 1]} : vector<8x20xbf16> to vector<8x16xbf16>
    %36 = vector.extract_strided_slice %29 {offsets = [0, 4], sizes = [8, 16], strides = [1, 1]} : vector<8x20xbf16> to vector<8x16xbf16>
    %37 = tpu.concatenate %34, %35, %36 in 0 : vector<8x16xbf16>, vector<8x16xbf16>, vector<8x16xbf16> -> vector<24x16xbf16>
    %c0_20 = arith.constant 0 : index
    %c0_21 = arith.constant 0 : index
    %38 = vector.load %arg5[%c0_20, %c0_21] : memref<8x24xbf16, #tpu.memory_space<vmem>>, vector<8x24xbf16>
    %cst_22 = arith.constant dense<0.000000e+00> : vector<8x16xf32>
    %39 = tpu.matmul %38, %37, %cst_22 {dimension_numbers = #tpu.dot_dimension_numbers<[1], [0], [0], [1], [0, 0, 1, 1], [], []>} : vector<8x24xbf16>, vector<24x16xbf16>, vector<8x16xf32> -> vector<8x16xf32>
    %c0_23 = arith.constant 0 : index
    %c0_24 = arith.constant 0 : index
    %40 = vector.load %arg6[%c0_23, %c0_24] : memref<8x1xf32, #tpu.memory_space<vmem>>, vector<8x1xf32>
    %41 = vector.broadcast %40 : vector<8x1xf32> to vector<8x16xf32>
    %42 = arith.addf %39, %41 : vector<8x16xf32>
    %cst_25 = arith.constant 0.000000e+00 : f32
    %43 = vector.broadcast %cst_25 : f32 to vector<8x16xf32>
    %44 = arith.maximumf %42, %43 : vector<8x16xf32>
    %45 = arith.addf %44, %25 : vector<8x16xf32>
    %cst_26 = arith.constant 0.000000e+00 : f32
    %46 = vector.broadcast %cst_26 : f32 to vector<8x16xf32>
    %47 = arith.maximumf %45, %46 : vector<8x16xf32>
    %c0_27 = arith.constant 0 : index
    %c0_28 = arith.constant 0 : index
    %c0_29 = arith.constant 0 : index
    %48 = vector.load %arg7[%c0_27, %c0_28, %c0_29] : memref<2x8x16xf32, #tpu.memory_space<vmem>>, vector<1x8x16xf32>
    %49 = vector.shape_cast %48 : vector<1x8x16xf32> to vector<8x16xf32>
    %50 = vector.shape_cast %47 : vector<8x16xf32> to vector<1x8x16xf32>
    tpu.vector_store %arg7[%c0_27, %c0_28, %c0_29], %50 {strides = array<i32>} : memref<2x8x16xf32, #tpu.memory_space<vmem>>, vector<1x8x16xf32>,
    %c1 = arith.constant 1 : index
    %c0_30 = arith.constant 0 : index
    %c0_31 = arith.constant 0 : index
    %51 = vector.load %arg2[%c1, %c0_30, %c0_31] : memref<2x4x16xf32, #tpu.memory_space<vmem>>, vector<1x4x16xf32>
    %52 = vector.shape_cast %51 : vector<1x4x16xf32> to vector<4x16xf32>
    %53 = arith.truncf %52 : vector<4x16xf32> to vector<4x16xbf16>
    %c1_32 = arith.constant 1 : index
    %c0_33 = arith.constant 0 : index
    %c0_34 = arith.constant 0 : index
    %54 = vector.load %arg8[%c1_32, %c0_33, %c0_34] : memref<2x4x4xbf16, #tpu.memory_space<vmem>>, vector<1x4x4xbf16>
    %55 = vector.shape_cast %54 : vector<1x4x4xbf16> to vector<4x4xbf16>
    %56 = tpu.concatenate %55, %53 in 1 : vector<4x4xbf16>, vector<4x16xbf16> -> vector<4x20xbf16>
    %57 = vector.extract_strided_slice %56 {offsets = [0, 16], sizes = [4, 4], strides = [1, 1]} : vector<4x20xbf16> to vector<4x4xbf16>
    %c1_35 = arith.constant 1 : index
    %c0_36 = arith.constant 0 : index
    %c0_37 = arith.constant 0 : index
    %58 = vector.load %arg8[%c1_35, %c0_36, %c0_37] : memref<2x4x4xbf16, #tpu.memory_space<vmem>>, vector<1x4x4xbf16>
    %59 = vector.shape_cast %58 : vector<1x4x4xbf16> to vector<4x4xbf16>
    %60 = vector.shape_cast %57 : vector<4x4xbf16> to vector<1x4x4xbf16>
    tpu.vector_store %arg8[%c1_35, %c0_36, %c0_37], %60 {strides = array<i32>} : memref<2x4x4xbf16, #tpu.memory_space<vmem>>, vector<1x4x4xbf16>,
    %61 = vector.extract_strided_slice %56 {offsets = [0, 0], sizes = [4, 16], strides = [1, 1]} : vector<4x20xbf16> to vector<4x16xbf16>
    %62 = vector.extract_strided_slice %56 {offsets = [0, 2], sizes = [4, 16], strides = [1, 1]} : vector<4x20xbf16> to vector<4x16xbf16>
    %63 = vector.extract_strided_slice %56 {offsets = [0, 4], sizes = [4, 16], strides = [1, 1]} : vector<4x20xbf16> to vector<4x16xbf16>
    %64 = tpu.concatenate %61, %62, %63 in 0 : vector<4x16xbf16>, vector<4x16xbf16>, vector<4x16xbf16> -> vector<12x16xbf16>
    %c0_38 = arith.constant 0 : index
    %c0_39 = arith.constant 0 : index
    %65 = vector.load %arg3[%c0_38, %c0_39] : memref<16x12xbf16, #tpu.memory_space<vmem>>, vector<16x12xbf16>
    %cst_40 = arith.constant dense<0.000000e+00> : vector<16x16xf32>
    %66 = tpu.matmul %65, %64, %cst_40 {dimension_numbers = #tpu.dot_dimension_numbers<[1], [0], [0], [1], [0, 0, 1, 1], [], []>} : vector<16x12xbf16>, vector<12x16xbf16>, vector<16x16xf32> -> vector<16x16xf32>
    %c0_41 = arith.constant 0 : index
    %c0_42 = arith.constant 0 : index
    %67 = vector.load %arg4[%c0_41, %c0_42] : memref<16x1xf32, #tpu.memory_space<vmem>>, vector<16x1xf32>
    %68 = vector.broadcast %67 : vector<16x1xf32> to vector<16x16xf32>
    %69 = arith.addf %66, %68 : vector<16x16xf32>
    %70 = vector.extract_strided_slice %69 {offsets = [0, 0], sizes = [8, 16], strides = [1, 1]} : vector<16x16xf32> to vector<8x16xf32>
    %cst_43 = arith.constant 0.000000e+00 : f32
    %71 = vector.broadcast %cst_43 : f32 to vector<8x16xf32>
    %72 = arith.maximumf %70, %71 : vector<8x16xf32>
    %73 = vector.extract_strided_slice %69 {offsets = [8, 0], sizes = [8, 16], strides = [1, 1]} : vector<16x16xf32> to vector<8x16xf32>
    %74 = arith.truncf %72 : vector<8x16xf32> to vector<8x16xbf16>
    %c1_44 = arith.constant 1 : index
    %c0_45 = arith.constant 0 : index
    %c0_46 = arith.constant 0 : index
    %75 = vector.load %arg9[%c1_44, %c0_45, %c0_46] : memref<2x8x4xbf16, #tpu.memory_space<vmem>>, vector<1x8x4xbf16>
    %76 = vector.shape_cast %75 : vector<1x8x4xbf16> to vector<8x4xbf16>
    %77 = tpu.concatenate %76, %74 in 1 : vector<8x4xbf16>, vector<8x16xbf16> -> vector<8x20xbf16>
    %78 = vector.extract_strided_slice %77 {offsets = [0, 16], sizes = [8, 4], strides = [1, 1]} : vector<8x20xbf16> to vector<8x4xbf16>
    %c1_47 = arith.constant 1 : index
    %c0_48 = arith.constant 0 : index
    %c0_49 = arith.constant 0 : index
    %79 = vector.load %arg9[%c1_47, %c0_48, %c0_49] : memref<2x8x4xbf16, #tpu.memory_space<vmem>>, vector<1x8x4xbf16>
    %80 = vector.shape_cast %79 : vector<1x8x4xbf16> to vector<8x4xbf16>
    %81 = vector.shape_cast %78 : vector<8x4xbf16> to vector<1x8x4xbf16>
    tpu.vector_store %arg9[%c1_47, %c0_48, %c0_49], %81 {strides = array<i32>} : memref<2x8x4xbf16, #tpu.memory_space<vmem>>, vector<1x8x4xbf16>,
    %82 = vector.extract_strided_slice %77 {offsets = [0, 0], sizes = [8, 16], strides = [1, 1]} : vector<8x20xbf16> to vector<8x16xbf16>
    %83 = vector.extract_strided_slice %77 {offsets = [0, 2], sizes = [8, 16], strides = [1, 1]} : vector<8x20xbf16> to vector<8x16xbf16>
    %84 = vector.extract_strided_slice %77 {offsets = [0, 4], sizes = [8, 16], strides = [1, 1]} : vector<8x20xbf16> to vector<8x16xbf16>
    %85 = tpu.concatenate %82, %83, %84 in 0 : vector<8x16xbf16>, vector<8x16xbf16>, vector<8x16xbf16> -> vector<24x16xbf16>
    %c0_50 = arith.constant 0 : index
    %c0_51 = arith.constant 0 : index
    %86 = vector.load %arg5[%c0_50, %c0_51] : memref<8x24xbf16, #tpu.memory_space<vmem>>, vector<8x24xbf16>
    %cst_52 = arith.constant dense<0.000000e+00> : vector<8x16xf32>
    %87 = tpu.matmul %86, %85, %cst_52 {dimension_numbers = #tpu.dot_dimension_numbers<[1], [0], [0], [1], [0, 0, 1, 1], [], []>} : vector<8x24xbf16>, vector<24x16xbf16>, vector<8x16xf32> -> vector<8x16xf32>
    %c0_53 = arith.constant 0 : index
    %c0_54 = arith.constant 0 : index
    %88 = vector.load %arg6[%c0_53, %c0_54] : memref<8x1xf32, #tpu.memory_space<vmem>>, vector<8x1xf32>
    %89 = vector.broadcast %88 : vector<8x1xf32> to vector<8x16xf32>
    %90 = arith.addf %87, %89 : vector<8x16xf32>
    %cst_55 = arith.constant 0.000000e+00 : f32
    %91 = vector.broadcast %cst_55 : f32 to vector<8x16xf32>
    %92 = arith.maximumf %90, %91 : vector<8x16xf32>
    %93 = arith.addf %92, %73 : vector<8x16xf32>
    %cst_56 = arith.constant 0.000000e+00 : f32
    %94 = vector.broadcast %cst_56 : f32 to vector<8x16xf32>
    %95 = arith.maximumf %93, %94 : vector<8x16xf32>
    %c1_57 = arith.constant 1 : index
    %c0_58 = arith.constant 0 : index
    %c0_59 = arith.constant 0 : index
    %96 = vector.load %arg7[%c1_57, %c0_58, %c0_59] : memref<2x8x16xf32, #tpu.memory_space<vmem>>, vector<1x8x16xf32>
    %97 = vector.shape_cast %96 : vector<1x8x16xf32> to vector<8x16xf32>
    %98 = vector.shape_cast %95 : vector<8x16xf32> to vector<1x8x16xf32>
    tpu.vector_store %arg7[%c1_57, %c0_58, %c0_59], %98 {strides = array<i32>} : memref<2x8x16xf32, #tpu.memory_space<vmem>>, vector<1x8x16xf32>,
    return
  }
  func.func @transform_0(%arg0: i32, %arg1: i32) -> (i32, i32, i32) {
    %c0_i32 = arith.constant 0 : i32
    %c0_i32_0 = arith.constant 0 : i32
    return %arg0, %c0_i32, %arg1 : i32, i32, i32
  }
  func.func @transform_1(%arg0: i32, %arg1: i32) -> (i32, i32) {
    %c0_i32 = arith.constant 0 : i32
    %c0_i32_0 = arith.constant 0 : i32
    %c0_i32_1 = arith.constant 0 : i32
    return %c0_i32, %c0_i32_0 : i32, i32
  }
  func.func @transform_2(%arg0: i32, %arg1: i32) -> (i32, i32) {
    %c0_i32 = arith.constant 0 : i32
    %c0_i32_0 = arith.constant 0 : i32
    %c0_i32_1 = arith.constant 0 : i32
    return %c0_i32, %c0_i32_0 : i32, i32
  }
  func.func @transform_3(%arg0: i32, %arg1: i32) -> (i32, i32) {
    %c0_i32 = arith.constant 0 : i32
    %c0_i32_0 = arith.constant 0 : i32
    %c0_i32_1 = arith.constant 0 : i32
    return %c0_i32, %c0_i32_0 : i32, i32
  }
  func.func @transform_4(%arg0: i32, %arg1: i32) -> (i32, i32) {
    %c0_i32 = arith.constant 0 : i32
    %c0_i32_0 = arith.constant 0 : i32
    %c0_i32_1 = arith.constant 0 : i32
    return %c0_i32, %c0_i32_0 : i32, i32
  }
  func.func @transform_5(%arg0: i32, %arg1: i32) -> (i32, i32, i32) {
    %c0_i32 = arith.constant 0 : i32
    %c0_i32_0 = arith.constant 0 : i32
    return %arg0, %c0_i32, %arg1 : i32, i32, i32
  }
}

</mosaic_0001>

<llo_original>
// kernel: temporal_block_forward.1
$region0: #{temporal_block_forward.1}
  #allocation0 [shape = 'u32[]', space=smem, size = 0x4, offset = 0x4, fixed_abs, tag = 'smem constant byte address 0x4 - core index']
  #allocation1 [shape = 'u32[144,128]{1,0:T(1,128)}', space=vmem, size = 0x12000, scoped, tag = 'internal scratch']
  #allocation2 [shape = 'bf16[2,4,4]{2,1,0:T(4,128)(2,1)}', space=vmem, size = 0x800, scoped, tag = 'scratch operand']
  #allocation3 [shape = 'bf16[2,8,4]{2,1,0:T(8,128)(2,1)}', space=vmem, size = 0x1000, scoped, tag = 'scratch operand']
  %s0 = inlined_call_operand.vmem [shape: f32[2,4,16], index: 0, kind: input, shape index: {}]
  %s1 = inlined_call_operand.vmem [shape: bf16[16,12], index: 1, kind: input, shape index: {}]
  %s2 = inlined_call_operand.vmem [shape: f32[16,1], index: 2, kind: input, shape index: {}]
  %s3 = inlined_call_operand.vmem [shape: bf16[8,24], index: 3, kind: input, shape index: {}]
  %s4 = inlined_call_operand.vmem [shape: f32[8,1], index: 4, kind: input, shape index: {}]
  %s5 = inlined_call_operand.hbm [shape: f32[2,8,16], index: 5, kind: output, shape index: {}]
  %s6 = sld [smem:[#allocation0]]
  $region34: #{temporal_block_forward.1} parent=0
    _
  %s8 = ssub.s32 1, %s6
  %s9 = scalar_select 0, %s8, %s6
  $region1: #{temporal_block_forward.1} parent=0
    #allocation4 [shape = 'u8[8192]{0}', space=vmem, size = 0x2000, scoped, tag = 'output window, operand 0, single buffered']
    #allocation5 [shape = 's32[1]{0}', space=sflag, size = 0x4, scoped, tag = 'scoped memory for temporal_block_forward.1']
    %10 = vsyncpa [#allocation5], 0
    // Predicated region
    $region2: #{temporal_block_forward.1} parent=1 // pred_check
      _
    $region3: #{temporal_block_forward.1} parent=1 // pred_check_branch
      %12 = sbr.rel (0) target = $region5
    $region4: #{temporal_block_forward.1} parent=1 // pred_region
      _
    $region5: #{temporal_block_forward.1} parent=1 // pred_fallthru
      _
    // Predicated region
    $region6: #{temporal_block_forward.1} parent=1 // pred_check
      _
    $region7: #{temporal_block_forward.1} parent=1 // pred_check_branch
      %14 = sbr.rel (0) target = $region9
    $region8: #{temporal_block_forward.1} parent=1 // pred_region
      _
    $region9: #{temporal_block_forward.1} parent=1 // pred_fallthru
      _
    // Predicated region
    $region10: #{temporal_block_forward.1} parent=1 // pred_check
      _
    $region11: #{temporal_block_forward.1} parent=1 // pred_check_branch
      %16 = sbr.rel (0) target = $region13
    $region12: #{temporal_block_forward.1} parent=1 // pred_region
      _
    $region13: #{temporal_block_forward.1} parent=1 // pred_fallthru
      _
    // Predicated region
    $region14: #{temporal_block_forward.1} parent=1 // pred_check
      _
    $region15: #{temporal_block_forward.1} parent=1 // pred_check_branch
      %18 = sbr.rel (0) target = $region17
    $region16: #{temporal_block_forward.1} parent=1 // pred_region
      _
    $region17: #{temporal_block_forward.1} parent=1 // pred_fallthru
      _
    // Predicated region
    $region18: #{temporal_block_forward.1} parent=1 // pred_check
      _
    $region19: #{temporal_block_forward.1} parent=1 // pred_check_branch
      %20 = sbr.rel (0) target = $region21
    $region20: #{temporal_block_forward.1} parent=1 // pred_region
      _
    $region21: #{temporal_block_forward.1} parent=1 // pred_fallthru
      _
    %p22 = scmp.eq.s32.totalorder 0, 0
    // Predicated region
    $region22: #{temporal_block_forward.1} parent=1 // pred_check
      %p23 = pneg %p22
    $region23: #{temporal_block_forward.1} parent=1 // pred_check_branch
      %25 = sbr.rel (%p23) target = $region25
    $region24: #{temporal_block_forward.1} parent=1 // pred_region
      %vm26 = vcmask 25600
      %27 = vst.msk [vmem:[#allocation2] sm:$0x3] %vm26, 0
      %28 = vst.msk [vmem:[#allocation2 + $0x2] sm:$0x3] %vm26, 0
      %vm29 = vcmask 27648
      %30 = vst.msk [vmem:[#allocation3] sm:$0xf] %vm29, 0
      %31 = vst.msk [vmem:[#allocation3 + $0x4] sm:$0xf] %vm29, 0
    $region25: #{temporal_block_forward.1} parent=1 // pred_fallthru
      _
    %v32 = vld [vmem:[%s0] sm:$0xf]
    %v33 = vpack.c.bf16 %v32, %v32
    %v34 = vld [vmem:[#allocation2] sm:$0x3]
    %36 = vrot.lane.b32.xlu0 %v33, 4
    %v37 = vpop.permute.xlu0 %36
    %vm38 = vcmask 31744
    %v41 = vsel %vm38, %v34, %v37
    %v44 = vunpack.c.l.s4 1983009808
    %v45 = vunpack.c.0.s8 %v44
    %v46 = vlaneseq
    %v47 = vshrl.u32 %v46, 7
    %v48 = vsub.s32 %v45, %v47
    %v49 = vrot.slane %v41, %v48
    %50 = vrot.lane.b32.xlu0 %v49, 112
    %v51 = vpop.permute.xlu0 %50
    %vm53 = vcmask 25600
    %54 = vst.msk [vmem:[#allocation2] sm:$0x3] %vm53, %v51
    %v55 = vrot.slane %v41, 6
    %56 = vrot.lane.b32.xlu0 %v55, 126
    %v57 = vpop.permute.xlu0 %56
    %v58 = vrot.slane %v41, 4
    %59 = vrot.lane.b32.xlu0 %v58, 124
    %v60 = vpop.permute.xlu0 %59
    %vm61 = vcmask 1041408
    %v63 = vsel %vm61, %v41, %v57
    %vm64 = vcmask 1043456
    %v66 = vsel %vm64, %v63, %v60
    %v67 = vld [vmem:[%s1] sm:$0xf]
    %v68 = vld [vmem:[%s1 + $0x4] sm:$0xf]
    %v69 = vld [vmem:[%s2] sm:$0xff]
    %v70 = vld [vmem:[%s2 + $0x8] sm:$0xff]
    %72 = vset.pattern.permute.xlu0 0
    %73 = vperm.xlu0 %72, %v69
    %v74 = vpop.permute.xlu0 %73
    %77 = vset.pattern.permute.xlu0 0
    %78 = vperm.xlu0 %77, %v70
    %v79 = vpop.permute.xlu0 %78
    %v83 = vunpack.c.l.b16 %v67
    %v84 = vunpack.c.l.b16 %v68
    %v85 = vpack.c.b16 %v84, %v83
    %vm86 = vcmask 97280
    %v88 = vsel %vm86, %v85, 0
    %vm90 = vcmask 1045504
    %v91 = vsel %vm90, %v66, 0
    %93 = vmatprep.subr.bf16.mxu0 0
    %94 = vmatpush1.bf16.msra.mxu0 %v91
    %95 = vmatprep.subr.bf16.mxu0 0
    %96 = vmatpush1.bf16.msra.mxu0 0
    %97 = vmatprep.subr.bf16.mxu0 0
    %98 = vmatpush1.bf16.msra.mxu0 0
    %99 = vmatprep.subr.bf16.mxu0 0
    %100 = vmatpush1.bf16.msra.mxu0 0
    %101 = vmatprep.subr.bf16.mxu0 0
    %102 = vmatpush1.bf16.msra.mxu0 0
    %103 = vmatprep.subr.bf16.mxu0 0
    %104 = vmatpush1.bf16.msra.mxu0 0
    %105 = vmatprep.subr.bf16.mxu0 0
    %106 = vmatpush1.bf16.msra.mxu0 0
    %107 = vmatprep.subr.bf16.mxu0 0
    %108 = vmatpush1.bf16.msra.mxu0 0
    %109 = vmatprep.subr.bf16.mxu0 0
    %110 = vmatpush1.bf16.msra.mxu0 0
    %111 = vmatprep.subr.bf16.mxu0 0
    %112 = vmatpush1.bf16.msra.mxu0 0
    %113 = vmatprep.subr.bf16.mxu0 0
    %114 = vmatpush1.bf16.msra.mxu0 0
    %115 = vmatprep.subr.bf16.mxu0 0
    %116 = vmatpush1.bf16.msra.mxu0 0
    %117 = vmatprep.subr.bf16.mxu0 0
    %118 = vmatpush1.bf16.msra.mxu0 0
    %119 = vmatprep.subr.bf16.mxu0 0
    %120 = vmatpush1.bf16.msra.mxu0 0
    %121 = vmatprep.subr.bf16.mxu0 0
    %122 = vmatpush1.bf16.msra.mxu0 0
    %123 = vmatprep.subr.bf16.mxu0 0
    %124 = vmatpush1.bf16.msra.mxu0 0
    %125 = vmatprep.mubr.bf16.mxu0 0
    %126 = vmatmul.mubr.bf16.gmra.mrb[0].mxu0 %v88
    %v127 = vpop.f32.mrb[0].mxu0
    %v128 = vadd.f32 %v74, %v127
    %v129 = vpop.f32.mrb[0].mxu0
    %v130 = vpop.f32.mrb[0].mxu0
    %v131 = vadd.f32 %v79, %v130
    %v132 = vpop.f32.mrb[0].mxu0
    %133 = vdwg.mxu0
    %v134 = vmax.f32 %v128, 0.0
    %v135 = vpack.c.bf16 %v134, %v134
    %v136 = vld [vmem:[#allocation3] sm:$0xf]
    %138 = vrot.lane.b32.xlu0 %v135, 4
    %v139 = vpop.permute.xlu0 %138
    %v142 = vsel %vm38, %v136, %v139
    %v144 = vunpack.c.l.b16 %v142
    %v145 = vpack.c.b16 %v144, %v144
    %146 = vrot.lane.b32.xlu0 %v145, 112
    %v147 = vpop.permute.xlu0 %146
    %vm149 = vcmask 27648
    %150 = vst.msk [vmem:[#allocation3] sm:$0xf] %vm149, %v147
    %v151 = vrot.slane %v142, 4
    %152 = vrot.lane.b32.xlu0 %v151, 126
    %v153 = vpop.permute.xlu0 %152
    %154 = vrot.lane.b32.xlu0 %v142, 124
    %v155 = vpop.permute.xlu0 %154
    %v157 = vsel %vm64, %v142, %v153
    %v159 = vld [vmem:[%s3] sm:$0xf]
    %v160 = vld [vmem:[%s4] sm:$0xff]
    %162 = vset.pattern.permute.xlu0 0
    %163 = vperm.xlu0 %162, %v160
    %v164 = vpop.permute.xlu0 %163
    %vm166 = vcmask 195584
    %v168 = vsel %vm166, %v159, 0
    %v171 = vsel %vm64, %v155, 0
    %173 = vmatprep.subr.bf16.mxu0 0
    %174 = vmatpush1.bf16.msra.mxu0 %v157
    %175 = vmatprep.subr.bf16.mxu0 0
    %176 = vmatpush1.bf16.msra.mxu0 %v171
    %177 = vmatprep.subr.bf16.mxu0 0
    %178 = vmatpush1.bf16.msra.mxu0 0
    %179 = vmatprep.subr.bf16.mxu0 0
    %180 = vmatpush1.bf16.msra.mxu0 0
    %181 = vmatprep.subr.bf16.mxu0 0
    %182 = vmatpush1.bf16.msra.mxu0 0
    %183 = vmatprep.subr.bf16.mxu0 0
    %184 = vmatpush1.bf16.msra.mxu0 0
    %185 = vmatprep.subr.bf16.mxu0 0
    %186 = vmatpush1.bf16.msra.mxu0 0
    %187 = vmatprep.subr.bf16.mxu0 0
    %188 = vmatpush1.bf16.msra.mxu0 0
    %189 = vmatprep.subr.bf16.mxu0 0
    %190 = vmatpush1.bf16.msra.mxu0 0
    %191 = vmatprep.subr.bf16.mxu0 0
    %192 = vmatpush1.bf16.msra.mxu0 0
    %193 = vmatprep.subr.bf16.mxu0 0
    %194 = vmatpush1.bf16.msra.mxu0 0
    %195 = vmatprep.subr.bf16.mxu0 0
    %196 = vmatpush1.bf16.msra.mxu0 0
    %197 = vmatprep.subr.bf16.mxu0 0
    %198 = vmatpush1.bf16.msra.mxu0 0
    %199 = vmatprep.subr.bf16.mxu0 0
    %200 = vmatpush1.bf16.msra.mxu0 0
    %201 = vmatprep.subr.bf16.mxu0 0
    %202 = vmatpush1.bf16.msra.mxu0 0
    %203 = vmatprep.subr.bf16.mxu0 0
    %204 = vmatpush1.bf16.msra.mxu0 0
    %205 = vmatprep.mubr.bf16.mxu0 0
    %206 = vmatmul.mubr.bf16.gmra.mrb[0].mxu0 %v168
    %v207 = vpop.f32.mrb[0].mxu0
    %v208 = vadd.f32 %v164, %v207
    %v209 = vpop.f32.mrb[0].mxu0
    %v210 = vpop.f32.mrb[0].mxu0
    %v211 = vpop.f32.mrb[0].mxu0
    %212 = vdwg.mxu0
    %v213 = vmax.f32 %v208, 0.0
    %v214 = vadd.f32 %v213, %v131
    %v215 = vmax.f32 %v214, 0.0
    %vm216 = vcmask 130048
    %217 = vst.msk [vmem:[#allocation4] sm:$0xff] %vm216, %v215
    %s218 = scalar_lea.vmem %s0, 4
    %v219 = vld [vmem:[%s218] sm:$0xf]
    %v220 = vpack.c.bf16 %v219, %v219
    %s221 = scalar_lea.vmem [#allocation2], 2
    %v222 = vld [vmem:[%s221] sm:$0x3]
    %224 = vrot.lane.b32.xlu0 %v220, 4
    %v225 = vpop.permute.xlu0 %224
    %v228 = vsel %vm38, %v222, %v225
    %v231 = vunpack.c.l.s4 1983009808
    %v232 = vunpack.c.0.s8 %v231
    %v233 = vlaneseq
    %v234 = vshrl.u32 %v233, 7
    %v235 = vsub.s32 %v232, %v234
    %v236 = vrot.slane %v228, %v235
    %237 = vrot.lane.b32.xlu0 %v236, 112
    %v238 = vpop.permute.xlu0 %237
    %240 = vst.msk [vmem:[%s221] sm:$0x3] %vm53, %v238
    %v241 = vrot.slane %v228, 6
    %242 = vrot.lane.b32.xlu0 %v241, 126
    %v243 = vpop.permute.xlu0 %242
    %v244 = vrot.slane %v228, 4
    %245 = vrot.lane.b32.xlu0 %v244, 124
    %v246 = vpop.permute.xlu0 %245
    %v248 = vsel %vm61, %v228, %v243
    %v250 = vsel %vm64, %v248, %v246
    %v251 = vld [vmem:[%s1] sm:$0xf]
    %v252 = vld [vmem:[%s1 + $0x4] sm:$0xf]
    %v253 = vld [vmem:[%s2] sm:$0xff]
    %v254 = vld [vmem:[%s2 + $0x8] sm:$0xff]
    %256 = vset.pattern.permute.xlu0 0
    %257 = vperm.xlu0 %256, %v253
    %v258 = vpop.permute.xlu0 %257
    %261 = vset.pattern.permute.xlu0 0
    %262 = vperm.xlu0 %261, %v254
    %v263 = vpop.permute.xlu0 %262
    %v267 = vunpack.c.l.b16 %v251
    %v268 = vunpack.c.l.b16 %v252
    %v269 = vpack.c.b16 %v268, %v267
    %v271 = vsel %vm86, %v269, 0
    %v273 = vsel %vm90, %v250, 0
    %275 = vmatprep.subr.bf16.mxu0 0
    %276 = vmatpush1.bf16.msra.mxu0 %v273
    %277 = vmatprep.subr.bf16.mxu0 0
    %278 = vmatpush1.bf16.msra.mxu0 0
    %279 = vmatprep.subr.bf16.mxu0 0
    %280 = vmatpush1.bf16.msra.mxu0 0
    %281 = vmatprep.subr.bf16.mxu0 0
    %282 = vmatpush1.bf16.msra.mxu0 0
    %283 = vmatprep.subr.bf16.mxu0 0
    %284 = vmatpush1.bf16.msra.mxu0 0
    %285 = vmatprep.subr.bf16.mxu0 0
    %286 = vmatpush1.bf16.msra.mxu0 0
    %287 = vmatprep.subr.bf16.mxu0 0
    %288 = vmatpush1.bf16.msra.mxu0 0
    %289 = vmatprep.subr.bf16.mxu0 0
    %290 = vmatpush1.bf16.msra.mxu0 0
    %291 = vmatprep.subr.bf16.mxu0 0
    %292 = vmatpush1.bf16.msra.mxu0 0
    %293 = vmatprep.subr.bf16.mxu0 0
    %294 = vmatpush1.bf16.msra.mxu0 0
    %295 = vmatprep.subr.bf16.mxu0 0
    %296 = vmatpush1.bf16.msra.mxu0 0
    %297 = vmatprep.subr.bf16.mxu0 0
    %298 = vmatpush1.bf16.msra.mxu0 0
    %299 = vmatprep.subr.bf16.mxu0 0
    %300 = vmatpush1.bf16.msra.mxu0 0
    %301 = vmatprep.subr.bf16.mxu0 0
    %302 = vmatpush1.bf16.msra.mxu0 0
    %303 = vmatprep.subr.bf16.mxu0 0
    %304 = vmatpush1.bf16.msra.mxu0 0
    %305 = vmatprep.subr.bf16.mxu0 0
    %306 = vmatpush1.bf16.msra.mxu0 0
    %307 = vmatprep.mubr.bf16.mxu0 0
    %308 = vmatmul.mubr.bf16.gmra.mrb[0].mxu0 %v271
    %v309 = vpop.f32.mrb[0].mxu0
    %v310 = vadd.f32 %v258, %v309
    %v311 = vpop.f32.mrb[0].mxu0
    %v312 = vpop.f32.mrb[0].mxu0
    %v313 = vadd.f32 %v263, %v312
    %v314 = vpop.f32.mrb[0].mxu0
    %315 = vdwg.mxu0
    %v316 = vmax.f32 %v310, 0.0
    %v317 = vpack.c.bf16 %v316, %v316
    %s318 = scalar_lea.vmem [#allocation3], 4
    %v319 = vld [vmem:[%s318] sm:$0xf]
    %321 = vrot.lane.b32.xlu0 %v317, 4
    %v322 = vpop.permute.xlu0 %321
    %v325 = vsel %vm38, %v319, %v322
    %v327 = vunpack.c.l.b16 %v325
    %v328 = vpack.c.b16 %v327, %v327
    %329 = vrot.lane.b32.xlu0 %v328, 112
    %v330 = vpop.permute.xlu0 %329
    %332 = vst.msk [vmem:[%s318] sm:$0xf] %vm149, %v330
    %v333 = vrot.slane %v325, 4
    %334 = vrot.lane.b32.xlu0 %v333, 126
    %v335 = vpop.permute.xlu0 %334
    %336 = vrot.lane.b32.xlu0 %v325, 124
    %v337 = vpop.permute.xlu0 %336
    %v339 = vsel %vm64, %v325, %v335
    %v341 = vld [vmem:[%s3] sm:$0xf]
    %v342 = vld [vmem:[%s4] sm:$0xff]
    %344 = vset.pattern.permute.xlu0 0
    %345 = vperm.xlu0 %344, %v342
    %v346 = vpop.permute.xlu0 %345
    %v349 = vsel %vm166, %v341, 0
    %v352 = vsel %vm64, %v337, 0
    %354 = vmatprep.subr.bf16.mxu0 0
    %355 = vmatpush1.bf16.msra.mxu0 %v339
    %356 = vmatprep.subr.bf16.mxu0 0
    %357 = vmatpush1.bf16.msra.mxu0 %v352
    %358 = vmatprep.subr.bf16.mxu0 0
    %359 = vmatpush1.bf16.msra.mxu0 0
    %360 = vmatprep.subr.bf16.mxu0 0
    %361 = vmatpush1.bf16.msra.mxu0 0
    %362 = vmatprep.subr.bf16.mxu0 0
    %363 = vmatpush1.bf16.msra.mxu0 0
    %364 = vmatprep.subr.bf16.mxu0 0
    %365 = vmatpush1.bf16.msra.mxu0 0
    %366 = vmatprep.subr.bf16.mxu0 0
    %367 = vmatpush1.bf16.msra.mxu0 0
    %368 = vmatprep.subr.bf16.mxu0 0
    %369 = vmatpush1.bf16.msra.mxu0 0
    %370 = vmatprep.subr.bf16.mxu0 0
    %371 = vmatpush1.bf16.msra.mxu0 0
    %372 = vmatprep.subr.bf16.mxu0 0
    %373 = vmatpush1.bf16.msra.mxu0 0
    %374 = vmatprep.subr.bf16.mxu0 0
    %375 = vmatpush1.bf16.msra.mxu0 0
    %376 = vmatprep.subr.bf16.mxu0 0
    %377 = vmatpush1.bf16.msra.mxu0 0
    %378 = vmatprep.subr.bf16.mxu0 0
    %379 = vmatpush1.bf16.msra.mxu0 0
    %380 = vmatprep.subr.bf16.mxu0 0
    %381 = vmatpush1.bf16.msra.mxu0 0
    %382 = vmatprep.subr.bf16.mxu0 0
    %383 = vmatpush1.bf16.msra.mxu0 0
    %384 = vmatprep.subr.bf16.mxu0 0
    %385 = vmatpush1.bf16.msra.mxu0 0
    %386 = vmatprep.mubr.bf16.mxu0 0
    %387 = vmatmul.mubr.bf16.gmra.mrb[0].mxu0 %v349
    %v388 = vpop.f32.mrb[0].mxu0
    %v389 = vadd.f32 %v346, %v388
    %v390 = vpop.f32.mrb[0].mxu0
    %v391 = vpop.f32.mrb[0].mxu0
    %v392 = vpop.f32.mrb[0].mxu0
    %393 = vdwg.mxu0
    %v394 = vmax.f32 %v389, 0.0
    %v395 = vadd.f32 %v394, %v313
    %v396 = vmax.f32 %v395, 0.0
    %s397 = scalar_lea.vmem [#allocation4], 8
    %398 = vst.msk [vmem:[%s397] sm:$0xff] %vm216, %v396
    // Predicated region
    $region26: #{temporal_block_forward.1} parent=1 // pred_check
      _
    $region27: #{temporal_block_forward.1} parent=1 // pred_check_branch
      %400 = sbr.rel (0) target = $region29
    $region28: #{temporal_block_forward.1} parent=1 // pred_region
      %s402 = ssub.s32 256, 256
      %403 = vsyncadd [#allocation5], %s402
      %s404 = sshll.u32 [#allocation4], 4
      %s405 = int_to_ptr.vmem [resolvable:$true] %s404
      %410 = dma.vmem_to_hbm [thread:$0]  %s405, 256, %s5, [#allocation5], 128, 128, 8
    $region29: #{temporal_block_forward.1} parent=1 // pred_fallthru
      _
    // Predicated region
    $region30: #{temporal_block_forward.1} parent=1 // pred_check
      _
    $region31: #{temporal_block_forward.1} parent=1 // pred_check_branch
      %412 = sbr.rel (0) target = $region33
    $region32: #{temporal_block_forward.1} parent=1 // pred_region
      %413 = dma.done [#allocation5], 256
    $region33: #{temporal_block_forward.1} parent=1 // pred_fallthru
      _
    %414 = vsyncpa [#allocation5], 1

</llo_original>
